<compile_context>
chip_gen: v6e
topology: v6e:2x2x1
jax: 0.10.0
libtpu: 0.0.40
codegen_flags: <defaults>
</compile_context>

<pallas_src>
import functools

import jax
import jax.numpy as jnp
from jax.experimental import pallas as pl
from jax.experimental.pallas import tpu as pltpu


# ----------------------------------------------------------------------------
# Synthetic logic-rule configuration (deterministic, mirrors __init__ shapes)
# ----------------------------------------------------------------------------
TIME_TOLERANCE = 0.1
DECAY_RATE = 1.0
INTEGRAL_SEP = 0.05

MENTAL_TYPE_LIST = [0, 1]
ACTION_TYPE_LIST = [2, 3]
HEAD_PREDICATES_LIST = MENTAL_TYPE_LIST + ACTION_TYPE_LIST          # H = 4
NUM_RULES_BOOST_EACH_HEAD = {h: 1 for h in HEAD_PREDICATES_LIST}

# [base_m0, [w], base_m1, [w], base_a2, [w], base_a3, [w]]
INITIAL_RULE_PARAMS = [0.1, [0.09], 0.4, [0.1], 0.2, [0.9], 0.3, [0.5]]


def logic_rule():
    """One BEFORE-rule per head predicate: body(b) BEFORE head(h)."""
    body_of_head = {0: 2, 1: 3, 2: 0, 3: 1}
    template = {}
    for h in HEAD_PREDICATES_LIST:
        template[h] = {
            0: {
                'body_predicate_idx': [body_of_head[h]],
                'body_predicate_sign': [1],
                'head_predicate_sign': [1],
                'temporal_relation_idx': [(body_of_head[h], h)],
                'temporal_relation_type': ['BEFORE'],
            }
        }
    return template


def build_parameters():
    """model_parameters -> compile-time constants: base[H], weight*effect[H],
    body_predicate_of_head[H] (Python tuples, baked into the kernel)."""
    template = logic_rule()
    base, weff, body = [], [], []
    for idx, h in enumerate(HEAD_PREDICATES_LIST):
        b = float(INITIAL_RULE_PARAMS[idx * 2])
        w = float(INITIAL_RULE_PARAMS[idx * 2 + 1][0])
        e = 1.0 if template[h][0]['head_predicate_sign'][0] == 1 else -1.0
        base.append(b)
        weff.append(w * e)
        body.append(int(template[h][0]['body_predicate_idx'][0]))
    return tuple(base), tuple(weff), tuple(body)


# ----------------------------------------------------------------------------
# Pallas kernel
# ----------------------------------------------------------------------------
def _intensity_kernel(a_t_ref, m_t_ref, a_ty_ref, m_ty_ref, out_ref,
                      *, tol, decay, base, weff, body_of_head):
    # a_t_ref  : (Bt, La)  f32  action times (both queries AND action history)
    # m_t_ref  : (Bt, Lm)  f32  mental event times
    # a_ty_ref : (Bt, La)  i32  action event types
    # m_ty_ref : (Bt, Lm)  i32  mental event types
    # out_ref  : (H, Bt, La) f32  lane-dense conditional intensities
    # base / weff / body_of_head: Python tuples, compile-time constants.
    a_t = a_t_ref[...]                    # (Bt, La)
    m_t = m_t_ref[...]                    # (Bt, Lm)
    a_ty = a_ty_ref[...]                  # (Bt, La)
    m_ty = m_ty_ref[...]                  # (Bt, Lm)

    q = a_t[:, None, :]                   # (Bt, 1, La)   query times on lanes
    # diff[b, j, q] = cur_time(q) - t_body(j); events on sublanes, queries on lanes
    diff_a = q - a_t[:, :, None]          # (Bt, La, La)
    diff_m = q - m_t[:, :, None]          # (Bt, Lm, La)
    # BEFORE(body, head): (t_body - t_head < -tol) * exp(-decay*(t_head - t_body))
    kern_a = jnp.where(diff_a > tol, jnp.exp(-decay * diff_a), 0.0)
    kern_m = jnp.where(diff_m > tol, jnp.exp(-decay * diff_m), 0.0)

    for h in range(len(base)):            # H = 4, fully unrolled at trace time
        bh = body_of_head[h]              # Python int -> VPU compare, no DMA
        feat = (jnp.where(a_ty[:, :, None] == bh, kern_a, 0.0).sum(axis=1) +
                jnp.where(m_ty[:, :, None] == bh, kern_m, 0.0).sum(axis=1))  # (Bt, La)
        raw = base[h] + weff[h] * feat
        out_ref[h] = jnp.where(raw >= 0.0, jnp.maximum(raw, base[h]), jnp.exp(raw))


def logic_rule_decoder_forward(history_a, history_m, *, block_b=8):
    """history_a = (a_time[B,La], a_type[B,La]); history_m analogous.

    Returns intensities [B, La, H]: conditional intensity of every head
    predicate evaluated at each action event time in history_a.
    """
    a_time, a_type = history_a
    m_time, m_type = history_m
    B, La = a_time.shape
    Lm = m_time.shape[1]

    base, weff, body_of_head = build_parameters()
    H = len(base)

    # Batch blocking: amortize per-grid-step pipeline overhead.  For large B,
    # block_b can be raised (8-32); VMEM footprint per step is roughly
    # Bt*(La+Lm)*La*4 B for the kernel intermediates plus double-buffered
    # (Bt, La/Lm) input tiles — tiny at these shapes on all generations.
    if B <= block_b:
        Bt = B
        B_pad = B
    else:
        Bt = block_b
        B_pad = pl.cdiv(B, Bt) * Bt

    a_t = a_time.astype(jnp.float32)
    m_t = m_time.astype(jnp.float32)
    a_ty = a_type.astype(jnp.int32)
    m_ty = m_type.astype(jnp.int32)
    if B_pad != B:
        pad = B_pad - B
        a_t = jnp.pad(a_t, ((0, pad), (0, 0)))
        m_t = jnp.pad(m_t, ((0, pad), (0, 0)))
        a_ty = jnp.pad(a_ty, ((0, pad), (0, 0)), constant_values=-1)
        m_ty = jnp.pad(m_ty, ((0, pad), (0, 0)), constant_values=-1)

    kernel = functools.partial(
        _intensity_kernel,
        tol=TIME_TOLERANCE, decay=DECAY_RATE,
        base=base, weff=weff, body_of_head=body_of_head)

    # Output is emitted lane-dense as (H, B, La); transposed back below.
    out_hbl = pl.pallas_call(
        kernel,
        out_shape=jax.ShapeDtypeStruct((H, B_pad, La), jnp.float32),
        grid=(B_pad // Bt,),
        in_specs=[
            pl.BlockSpec((Bt, La), lambda i: (i, 0)),   # action times
            pl.BlockSpec((Bt, Lm), lambda i: (i, 0)),   # mental times
            pl.BlockSpec((Bt, La), lambda i: (i, 0)),   # action types (i32)
            pl.BlockSpec((Bt, Lm), lambda i: (i, 0)),   # mental types (i32)
        ],
        out_specs=pl.BlockSpec((H, Bt, La), lambda i: (0, i, 0)),
        compiler_params=pltpu.CompilerParams(
            dimension_semantics=("parallel",)),
    )(a_t, m_t, a_ty, m_ty)

    # (H, B, La) -> (B, La, H); cheap wrapper-side layout plumbing.
    return jnp.transpose(out_hbl, (1, 2, 0))[:B]


# ----------------------------------------------------------------------------
# Pure-JAX reference (same math, no Pallas) for a silent sanity check
# ----------------------------------------------------------------------------
def _reference(history_a, history_m):
    a_time, a_type = history_a
    m_time, m_type = history_m
    base, weff, body = build_parameters()
    base_a = jnp.asarray(base, jnp.float32)
    weff_a = jnp.asarray(weff, jnp.float32)
    body_a = jnp.asarray(body, jnp.int32)
    all_time = jnp.concatenate([a_time, m_time], axis=1).astype(jnp.float32)
    all_type = jnp.concatenate([a_type, m_type], axis=1)
    diff = a_time[:, :, None].astype(jnp.float32) - all_time[:, None, :]   # [B,La,L]
    kern = jnp.where(diff > TIME_TOLERANCE, jnp.exp(-DECAY_RATE * diff), 0.0)
    m_map = (all_type[:, :, None] == body_a[None, None, :]).astype(jnp.float32)
    feature = jnp.einsum('bql,blh->bqh', kern, m_map)
    raw = base_a[None, None, :] + weff_a[None, None, :] * feature
    return jnp.where(raw >= 0.0, jnp.maximum(raw, base_a[None, None, :]), jnp.exp(raw))


# TODO(synk): intensity_log_sum / intensity_integral / log_likelihood are
# `pass` in the reference module; only forward (per-event intensities) is done.

if __name__ == "__main__":
    key = jax.random.PRNGKey(0)
    B, La, Lm = 2, 8, 8

    k1, k2, k3, k4 = jax.random.split(key, 4)
    # Sorted event times in (0, 10); action types from {2,3}, mental from {0,1}.
    a_time = jnp.sort(jax.random.uniform(k1, (B, La), minval=0.0, maxval=10.0), axis=1)
    m_time = jnp.sort(jax.random.uniform(k2, (B, Lm), minval=0.0, maxval=10.0), axis=1)
    a_type = jax.random.randint(k3, (B, La), 2, 4).astype(jnp.int32)
    m_type = jax.random.randint(k4, (B, Lm), 0, 2).astype(jnp.int32)

    history_a = (a_time, a_type)
    history_m = (m_time, m_type)

    out = logic_rule_decoder_forward(history_a, history_m)
    out = jax.block_until_ready(out)

    ref = _reference(history_a, history_m)
    assert out.shape == (B, La, len(HEAD_PREDICATES_LIST))
    assert jnp.allclose(out, ref, rtol=1e-5, atol=1e-5), "mismatch vs reference"

    print("KERNEL_OK")
</pallas_src>

<mosaic_0001>
module attributes {stable_mosaic.version = 11 : i64} {
  func.func @_intensity_kernel(%arg0: i32, %arg1: memref<2x8xf32, #tpu.memory_space<vmem>>, %arg2: memref<2x8xf32, #tpu.memory_space<vmem>>, %arg3: memref<2x8xi32, #tpu.memory_space<vmem>>, %arg4: memref<2x8xi32, #tpu.memory_space<vmem>>, %arg5: memref<4x2x8xf32, #tpu.memory_space<vmem>>) attributes {dimension_semantics = [#tpu.dimension_semantics<parallel>], iteration_bounds = array<i64: 1>, scalar_prefetch = 0 : i64, scratch_operands = 0 : i64, tpu.core_type = #tpu.core_type<tc>, window_params = [{transform_indices = @transform_0, window_bounds = array<i64: 2, 8>}, {transform_indices = @transform_1, window_bounds = array<i64: 2, 8>}, {transform_indices = @transform_2, window_bounds = array<i64: 2, 8>}, {transform_indices = @transform_3, window_bounds = array<i64: 2, 8>}, {transform_indices = @transform_4, window_bounds = array<i64: 4, 2, 8>}]} {
    %c0 = arith.constant 0 : index
    %c0_0 = arith.constant 0 : index
    %0 = vector.load %arg1[%c0, %c0_0] : memref<2x8xf32, #tpu.memory_space<vmem>>, vector<2x8xf32>
    %c0_1 = arith.constant 0 : index
    %c0_2 = arith.constant 0 : index
    %1 = vector.load %arg2[%c0_1, %c0_2] : memref<2x8xf32, #tpu.memory_space<vmem>>, vector<2x8xf32>
    %c0_3 = arith.constant 0 : index
    %c0_4 = arith.constant 0 : index
    %2 = vector.load %arg3[%c0_3, %c0_4] : memref<2x8xi32, #tpu.memory_space<vmem>>, vector<2x8xi32>
    %c0_5 = arith.constant 0 : index
    %c0_6 = arith.constant 0 : index
    %3 = vector.load %arg4[%c0_5, %c0_6] : memref<2x8xi32, #tpu.memory_space<vmem>>, vector<2x8xi32>
    %4 = vector.shape_cast %0 : vector<2x8xf32> to vector<2x1x8xf32>
    %5 = vector.shape_cast %0 : vector<2x8xf32> to vector<2x8x1xf32>
    %6 = vector.broadcast %4 : vector<2x1x8xf32> to vector<2x8x8xf32>
    %7 = vector.broadcast %5 : vector<2x8x1xf32> to vector<2x8x8xf32>
    %8 = arith.subf %6, %7 : vector<2x8x8xf32>
    %9 = vector.shape_cast %1 : vector<2x8xf32> to vector<2x8x1xf32>
    %10 = vector.broadcast %4 : vector<2x1x8xf32> to vector<2x8x8xf32>
    %11 = vector.broadcast %9 : vector<2x8x1xf32> to vector<2x8x8xf32>
    %12 = arith.subf %10, %11 : vector<2x8x8xf32>
    %cst = arith.constant 1.000000e-01 : f32
    %13 = vector.broadcast %cst : f32 to vector<2x8x8xf32>
    %14 = arith.cmpf ogt, %8, %13 : vector<2x8x8xf32>
    %cst_7 = arith.constant -1.000000e+00 : f32
    %15 = vector.broadcast %cst_7 : f32 to vector<2x8x8xf32>
    %16 = arith.mulf %15, %8 : vector<2x8x8xf32>
    %17 = math.exp %16 : vector<2x8x8xf32>
    %cst_8 = arith.constant 0.000000e+00 : f32
    %18 = vector.broadcast %cst_8 : f32 to vector<2x8x8xf32>
    %19 = arith.select %14, %17, %18 : vector<2x8x8xi1>, vector<2x8x8xf32>
    %cst_9 = arith.constant 1.000000e-01 : f32
    %20 = vector.broadcast %cst_9 : f32 to vector<2x8x8xf32>
    %21 = arith.cmpf ogt, %12, %20 : vector<2x8x8xf32>
    %cst_10 = arith.constant -1.000000e+00 : f32
    %22 = vector.broadcast %cst_10 : f32 to vector<2x8x8xf32>
    %23 = arith.mulf %22, %12 : vector<2x8x8xf32>
    %24 = math.exp %23 : vector<2x8x8xf32>
    %cst_11 = arith.constant 0.000000e+00 : f32
    %25 = vector.broadcast %cst_11 : f32 to vector<2x8x8xf32>
    %26 = arith.select %21, %24, %25 : vector<2x8x8xi1>, vector<2x8x8xf32>
    %27 = vector.shape_cast %2 : vector<2x8xi32> to vector<2x8x1xi32>
    %c2_i32 = arith.constant 2 : i32
    %28 = vector.broadcast %c2_i32 : i32 to vector<2x8x1xi32>
    %29 = arith.cmpi eq, %27, %28 : vector<2x8x1xi32>
    %cst_12 = arith.constant 0.000000e+00 : f32
    %30 = vector.shape_cast %29 : vector<2x8x1xi1> to vector<2x8x1xi1>
    %31 = vector.broadcast %30 : vector<2x8x1xi1> to vector<2x8x8xi1>
    %32 = vector.broadcast %cst_12 : f32 to vector<2x8x8xf32>
    %33 = arith.select %31, %19, %32 : vector<2x8x8xi1>, vector<2x8x8xf32>
    %cst_13 = arith.constant dense<0.000000e+00> : vector<2x8xf32>
    %34 = vector.multi_reduction <add>, %33, %cst_13 [1] : vector<2x8x8xf32> to vector<2x8xf32>
    %35 = vector.shape_cast %3 : vector<2x8xi32> to vector<2x8x1xi32>
    %c2_i32_14 = arith.constant 2 : i32
    %36 = vector.broadcast %c2_i32_14 : i32 to vector<2x8x1xi32>
    %37 = arith.cmpi eq, %35, %36 : vector<2x8x1xi32>
    %cst_15 = arith.constant 0.000000e+00 : f32
    %38 = vector.shape_cast %37 : vector<2x8x1xi1> to vector<2x8x1xi1>
    %39 = vector.broadcast %38 : vector<2x8x1xi1> to vector<2x8x8xi1>
    %40 = vector.broadcast %cst_15 : f32 to vector<2x8x8xf32>
    %41 = arith.select %39, %26, %40 : vector<2x8x8xi1>, vector<2x8x8xf32>
    %cst_16 = arith.constant dense<0.000000e+00> : vector<2x8xf32>
    %42 = vector.multi_reduction <add>, %41, %cst_16 [1] : vector<2x8x8xf32> to vector<2x8xf32>
    %43 = arith.addf %34, %42 : vector<2x8xf32>
    %cst_17 = arith.constant 9.000000e-02 : f32
    %44 = vector.broadcast %cst_17 : f32 to vector<2x8xf32>
    %45 = arith.mulf %44, %43 : vector<2x8xf32>
    %cst_18 = arith.constant 1.000000e-01 : f32
    %46 = vector.broadcast %cst_18 : f32 to vector<2x8xf32>
    %47 = arith.addf %46, %45 : vector<2x8xf32>
    %cst_19 = arith.constant 0.000000e+00 : f32
    %48 = vector.broadcast %cst_19 : f32 to vector<2x8xf32>
    %49 = arith.cmpf oge, %47, %48 : vector<2x8xf32>
    %cst_20 = arith.constant 1.000000e-01 : f32
    %50 = vector.broadcast %cst_20 : f32 to vector<2x8xf32>
    %51 = arith.maximumf %47, %50 : vector<2x8xf32>
    %52 = math.exp %47 : vector<2x8xf32>
    %53 = arith.select %49, %51, %52 : vector<2x8xi1>, vector<2x8xf32>
    %c0_21 = arith.constant 0 : index
    %c0_22 = arith.constant 0 : index
    %c0_23 = arith.constant 0 : index
    %54 = vector.load %arg5[%c0_21, %c0_22, %c0_23] : memref<4x2x8xf32, #tpu.memory_space<vmem>>, vector<1x2x8xf32>
    %55 = vector.shape_cast %54 : vector<1x2x8xf32> to vector<2x8xf32>
    %56 = vector.shape_cast %53 : vector<2x8xf32> to vector<1x2x8xf32>
    tpu.vector_store %arg5[%c0_21, %c0_22, %c0_23], %56 {strides = array<i32>} : memref<4x2x8xf32, #tpu.memory_space<vmem>>, vector<1x2x8xf32>,
    %57 = vector.shape_cast %2 : vector<2x8xi32> to vector<2x8x1xi32>
    %c3_i32 = arith.constant 3 : i32
    %58 = vector.broadcast %c3_i32 : i32 to vector<2x8x1xi32>
    %59 = arith.cmpi eq, %57, %58 : vector<2x8x1xi32>
    %cst_24 = arith.constant 0.000000e+00 : f32
    %60 = vector.shape_cast %59 : vector<2x8x1xi1> to vector<2x8x1xi1>
    %61 = vector.broadcast %60 : vector<2x8x1xi1> to vector<2x8x8xi1>
    %62 = vector.broadcast %cst_24 : f32 to vector<2x8x8xf32>
    %63 = arith.select %61, %19, %62 : vector<2x8x8xi1>, vector<2x8x8xf32>
    %cst_25 = arith.constant dense<0.000000e+00> : vector<2x8xf32>
    %64 = vector.multi_reduction <add>, %63, %cst_25 [1] : vector<2x8x8xf32> to vector<2x8xf32>
    %65 = vector.shape_cast %3 : vector<2x8xi32> to vector<2x8x1xi32>
    %c3_i32_26 = arith.constant 3 : i32
    %66 = vector.broadcast %c3_i32_26 : i32 to vector<2x8x1xi32>
    %67 = arith.cmpi eq, %65, %66 : vector<2x8x1xi32>
    %cst_27 = arith.constant 0.000000e+00 : f32
    %68 = vector.shape_cast %67 : vector<2x8x1xi1> to vector<2x8x1xi1>
    %69 = vector.broadcast %68 : vector<2x8x1xi1> to vector<2x8x8xi1>
    %70 = vector.broadcast %cst_27 : f32 to vector<2x8x8xf32>
    %71 = arith.select %69, %26, %70 : vector<2x8x8xi1>, vector<2x8x8xf32>
    %cst_28 = arith.constant dense<0.000000e+00> : vector<2x8xf32>
    %72 = vector.multi_reduction <add>, %71, %cst_28 [1] : vector<2x8x8xf32> to vector<2x8xf32>
    %73 = arith.addf %64, %72 : vector<2x8xf32>
    %cst_29 = arith.constant 1.000000e-01 : f32
    %74 = vector.broadcast %cst_29 : f32 to vector<2x8xf32>
    %75 = arith.mulf %74, %73 : vector<2x8xf32>
    %cst_30 = arith.constant 4.000000e-01 : f32
    %76 = vector.broadcast %cst_30 : f32 to vector<2x8xf32>
    %77 = arith.addf %76, %75 : vector<2x8xf32>
    %cst_31 = arith.constant 0.000000e+00 : f32
    %78 = vector.broadcast %cst_31 : f32 to vector<2x8xf32>
    %79 = arith.cmpf oge, %77, %78 : vector<2x8xf32>
    %cst_32 = arith.constant 4.000000e-01 : f32
    %80 = vector.broadcast %cst_32 : f32 to vector<2x8xf32>
    %81 = arith.maximumf %77, %80 : vector<2x8xf32>
    %82 = math.exp %77 : vector<2x8xf32>
    %83 = arith.select %79, %81, %82 : vector<2x8xi1>, vector<2x8xf32>
    %c1 = arith.constant 1 : index
    %c0_33 = arith.constant 0 : index
    %c0_34 = arith.constant 0 : index
    %84 = vector.load %arg5[%c1, %c0_33, %c0_34] : memref<4x2x8xf32, #tpu.memory_space<vmem>>, vector<1x2x8xf32>
    %85 = vector.shape_cast %84 : vector<1x2x8xf32> to vector<2x8xf32>
    %86 = vector.shape_cast %83 : vector<2x8xf32> to vector<1x2x8xf32>
    tpu.vector_store %arg5[%c1, %c0_33, %c0_34], %86 {strides = array<i32>} : memref<4x2x8xf32, #tpu.memory_space<vmem>>, vector<1x2x8xf32>,
    %87 = vector.shape_cast %2 : vector<2x8xi32> to vector<2x8x1xi32>
    %c0_i32 = arith.constant 0 : i32
    %88 = vector.broadcast %c0_i32 : i32 to vector<2x8x1xi32>
    %89 = arith.cmpi eq, %87, %88 : vector<2x8x1xi32>
    %cst_35 = arith.constant 0.000000e+00 : f32
    %90 = vector.shape_cast %89 : vector<2x8x1xi1> to vector<2x8x1xi1>
    %91 = vector.broadcast %90 : vector<2x8x1xi1> to vector<2x8x8xi1>
    %92 = vector.broadcast %cst_35 : f32 to vector<2x8x8xf32>
    %93 = arith.select %91, %19, %92 : vector<2x8x8xi1>, vector<2x8x8xf32>
    %cst_36 = arith.constant dense<0.000000e+00> : vector<2x8xf32>
    %94 = vector.multi_reduction <add>, %93, %cst_36 [1] : vector<2x8x8xf32> to vector<2x8xf32>
    %95 = vector.shape_cast %3 : vector<2x8xi32> to vector<2x8x1xi32>
    %c0_i32_37 = arith.constant 0 : i32
    %96 = vector.broadcast %c0_i32_37 : i32 to vector<2x8x1xi32>
    %97 = arith.cmpi eq, %95, %96 : vector<2x8x1xi32>
    %cst_38 = arith.constant 0.000000e+00 : f32
    %98 = vector.shape_cast %97 : vector<2x8x1xi1> to vector<2x8x1xi1>
    %99 = vector.broadcast %98 : vector<2x8x1xi1> to vector<2x8x8xi1>
    %100 = vector.broadcast %cst_38 : f32 to vector<2x8x8xf32>
    %101 = arith.select %99, %26, %100 : vector<2x8x8xi1>, vector<2x8x8xf32>
    %cst_39 = arith.constant dense<0.000000e+00> : vector<2x8xf32>
    %102 = vector.multi_reduction <add>, %101, %cst_39 [1] : vector<2x8x8xf32> to vector<2x8xf32>
    %103 = arith.addf %94, %102 : vector<2x8xf32>
    %cst_40 = arith.constant 0.899999976 : f32
    %104 = vector.broadcast %cst_40 : f32 to vector<2x8xf32>
    %105 = arith.mulf %104, %103 : vector<2x8xf32>
    %cst_41 = arith.constant 2.000000e-01 : f32
    %106 = vector.broadcast %cst_41 : f32 to vector<2x8xf32>
    %107 = arith.addf %106, %105 : vector<2x8xf32>
    %cst_42 = arith.constant 0.000000e+00 : f32
    %108 = vector.broadcast %cst_42 : f32 to vector<2x8xf32>
    %109 = arith.cmpf oge, %107, %108 : vector<2x8xf32>
    %cst_43 = arith.constant 2.000000e-01 : f32
    %110 = vector.broadcast %cst_43 : f32 to vector<2x8xf32>
    %111 = arith.maximumf %107, %110 : vector<2x8xf32>
    %112 = math.exp %107 : vector<2x8xf32>
    %113 = arith.select %109, %111, %112 : vector<2x8xi1>, vector<2x8xf32>
    %c2 = arith.constant 2 : index
    %c0_44 = arith.constant 0 : index
    %c0_45 = arith.constant 0 : index
    %114 = vector.load %arg5[%c2, %c0_44, %c0_45] : memref<4x2x8xf32, #tpu.memory_space<vmem>>, vector<1x2x8xf32>
    %115 = vector.shape_cast %114 : vector<1x2x8xf32> to vector<2x8xf32>
    %116 = vector.shape_cast %113 : vector<2x8xf32> to vector<1x2x8xf32>
    tpu.vector_store %arg5[%c2, %c0_44, %c0_45], %116 {strides = array<i32>} : memref<4x2x8xf32, #tpu.memory_space<vmem>>, vector<1x2x8xf32>,
    %117 = vector.shape_cast %2 : vector<2x8xi32> to vector<2x8x1xi32>
    %c1_i32 = arith.constant 1 : i32
    %118 = vector.broadcast %c1_i32 : i32 to vector<2x8x1xi32>
    %119 = arith.cmpi eq, %117, %118 : vector<2x8x1xi32>
    %cst_46 = arith.constant 0.000000e+00 : f32
    %120 = vector.shape_cast %119 : vector<2x8x1xi1> to vector<2x8x1xi1>
    %121 = vector.broadcast %120 : vector<2x8x1xi1> to vector<2x8x8xi1>
    %122 = vector.broadcast %cst_46 : f32 to vector<2x8x8xf32>
    %123 = arith.select %121, %19, %122 : vector<2x8x8xi1>, vector<2x8x8xf32>
    %cst_47 = arith.constant dense<0.000000e+00> : vector<2x8xf32>
    %124 = vector.multi_reduction <add>, %123, %cst_47 [1] : vector<2x8x8xf32> to vector<2x8xf32>
    %125 = vector.shape_cast %3 : vector<2x8xi32> to vector<2x8x1xi32>
    %c1_i32_48 = arith.constant 1 : i32
    %126 = vector.broadcast %c1_i32_48 : i32 to vector<2x8x1xi32>
    %127 = arith.cmpi eq, %125, %126 : vector<2x8x1xi32>
    %cst_49 = arith.constant 0.000000e+00 : f32
    %128 = vector.shape_cast %127 : vector<2x8x1xi1> to vector<2x8x1xi1>
    %129 = vector.broadcast %128 : vector<2x8x1xi1> to vector<2x8x8xi1>
    %130 = vector.broadcast %cst_49 : f32 to vector<2x8x8xf32>
    %131 = arith.select %129, %26, %130 : vector<2x8x8xi1>, vector<2x8x8xf32>
    %cst_50 = arith.constant dense<0.000000e+00> : vector<2x8xf32>
    %132 = vector.multi_reduction <add>, %131, %cst_50 [1] : vector<2x8x8xf32> to vector<2x8xf32>
    %133 = arith.addf %124, %132 : vector<2x8xf32>
    %cst_51 = arith.constant 5.000000e-01 : f32
    %134 = vector.broadcast %cst_51 : f32 to vector<2x8xf32>
    %135 = arith.mulf %134, %133 : vector<2x8xf32>
    %cst_52 = arith.constant 3.000000e-01 : f32
    %136 = vector.broadcast %cst_52 : f32 to vector<2x8xf32>
    %137 = arith.addf %136, %135 : vector<2x8xf32>
    %cst_53 = arith.constant 0.000000e+00 : f32
    %138 = vector.broadcast %cst_53 : f32 to vector<2x8xf32>
    %139 = arith.cmpf oge, %137, %138 : vector<2x8xf32>
    %cst_54 = arith.constant 3.000000e-01 : f32
    %140 = vector.broadcast %cst_54 : f32 to vector<2x8xf32>
    %141 = arith.maximumf %137, %140 : vector<2x8xf32>
    %142 = math.exp %137 : vector<2x8xf32>
    %143 = arith.select %139, %141, %142 : vector<2x8xi1>, vector<2x8xf32>
    %c3 = arith.constant 3 : index
    %c0_55 = arith.constant 0 : index
    %c0_56 = arith.constant 0 : index
    %144 = vector.load %arg5[%c3, %c0_55, %c0_56] : memref<4x2x8xf32, #tpu.memory_space<vmem>>, vector<1x2x8xf32>
    %145 = vector.shape_cast %144 : vector<1x2x8xf32> to vector<2x8xf32>
    %146 = vector.shape_cast %143 : vector<2x8xf32> to vector<1x2x8xf32>
    tpu.vector_store %arg5[%c3, %c0_55, %c0_56], %146 {strides = array<i32>} : memref<4x2x8xf32, #tpu.memory_space<vmem>>, vector<1x2x8xf32>,
    return
  }
  func.func @transform_0(%arg0: i32) -> (i32, i32) {
    %c0_i32 = arith.constant 0 : i32
    %c0_i32_0 = arith.constant 0 : i32
    return %arg0, %c0_i32 : i32, i32
  }
  func.func @transform_1(%arg0: i32) -> (i32, i32) {
    %c0_i32 = arith.constant 0 : i32
    %c0_i32_0 = arith.constant 0 : i32
    return %arg0, %c0_i32 : i32, i32
  }
  func.func @transform_2(%arg0: i32) -> (i32, i32) {
    %c0_i32 = arith.constant 0 : i32
    %c0_i32_0 = arith.constant 0 : i32
    return %arg0, %c0_i32 : i32, i32
  }
  func.func @transform_3(%arg0: i32) -> (i32, i32) {
    %c0_i32 = arith.constant 0 : i32
    %c0_i32_0 = arith.constant 0 : i32
    return %arg0, %c0_i32 : i32, i32
  }
  func.func @transform_4(%arg0: i32) -> (i32, i32, i32) {
    %c0_i32 = arith.constant 0 : i32
    %c0_i32_0 = arith.constant 0 : i32
    %c0_i32_1 = arith.constant 0 : i32
    return %c0_i32, %arg0, %c0_i32_0 : i32, i32, i32
  }
}

</mosaic_0001>

<llo_original>
// kernel: tpu_custom_call.1
$region0: #{tpu_custom_call.1}
  #allocation0 [shape = 'u32[]', space=smem, size = 0x4, offset = 0x4, fixed_abs, tag = 'smem constant byte address 0x4 - core index']
  #allocation1 [shape = 'u32[144,128]{1,0:T(1,128)}', space=vmem, size = 0x12000, scoped, tag = 'internal scratch']
  %s0 = inlined_call_operand.hbm [shape: f32[2,8], index: 0, kind: input, shape index: {}]
  %s1 = inlined_call_operand.hbm [shape: f32[2,8], index: 1, kind: input, shape index: {}]
  %s2 = inlined_call_operand.vmem [shape: s32[2,8], index: 2, kind: input, shape index: {}]
  %s3 = inlined_call_operand.vmem [shape: s32[2,8], index: 3, kind: input, shape index: {}]
  %s4 = inlined_call_operand.hbm [shape: f32[4,2,8], index: 4, kind: output, shape index: {}]
  %s5 = sld [smem:[#allocation0]]
  $region34: #{tpu_custom_call.1} parent=0
    _
  %s7 = ssub.s32 1, %s5
  %s8 = scalar_select 0, %s7, %s5
  $region1: #{tpu_custom_call.1} parent=0
    #allocation2 [shape = 'u8[1024]{0}', space=vmem, size = 0x400, scoped, tag = 'input window, operand 0, single buffered']
    #allocation3 [shape = 's32[1]{0}', space=sflag, size = 0x4, scoped, tag = 'scoped memory for tpu_custom_call.1']
    #allocation4 [shape = 's32[1]{0}', space=sflag, size = 0x4, scoped, tag = 'scoped memory for tpu_custom_call.1']
    #allocation5 [shape = 'u8[1024]{0}', space=vmem, size = 0x400, scoped, tag = 'input window, operand 1, single buffered']
    #allocation6 [shape = 's32[1]{0}', space=sflag, size = 0x4, scoped, tag = 'scoped memory for tpu_custom_call.1']
    #allocation7 [shape = 'u8[4096]{0}', space=vmem, size = 0x1000, scoped, tag = 'output window, operand 0, single buffered']
    %9 = vsyncpa [#allocation3], 0
    %10 = vsyncpa [#allocation6], 0
    %11 = vsyncpa [#allocation4], 0
    // Predicated region
    $region2: #{tpu_custom_call.1} parent=1 // pred_check
      _
    $region3: #{tpu_custom_call.1} parent=1 // pred_check_branch
      %13 = sbr.rel (0) target = $region5
    $region4: #{tpu_custom_call.1} parent=1 // pred_region
      %s15 = ssub.s32 32, 32
      %16 = vsyncadd [#allocation3], %s15
      %s18 = sshll.u32 [#allocation2], 4
      %s19 = int_to_ptr.vmem [resolvable:$true] %s18
      %21 = dma.hbm_to_vmem [thread:$0]  %s0, 32, %s19, [#allocation3]
    $region5: #{tpu_custom_call.1} parent=1 // pred_fallthru
      _
    // Predicated region
    $region6: #{tpu_custom_call.1} parent=1 // pred_check
      _
    $region7: #{tpu_custom_call.1} parent=1 // pred_check_branch
      %23 = sbr.rel (0) target = $region9
    $region8: #{tpu_custom_call.1} parent=1 // pred_region
      %s25 = ssub.s32 32, 32
      %26 = vsyncadd [#allocation6], %s25
      %s28 = sshll.u32 [#allocation5], 4
      %s29 = int_to_ptr.vmem [resolvable:$true] %s28
      %31 = dma.hbm_to_vmem [thread:$0]  %s1, 32, %s29, [#allocation6]
    $region9: #{tpu_custom_call.1} parent=1 // pred_fallthru
      _
    // Predicated region
    $region10: #{tpu_custom_call.1} parent=1 // pred_check
      _
    $region11: #{tpu_custom_call.1} parent=1 // pred_check_branch
      %33 = sbr.rel (0) target = $region13
    $region12: #{tpu_custom_call.1} parent=1 // pred_region
      _
    $region13: #{tpu_custom_call.1} parent=1 // pred_fallthru
      _
    // Predicated region
    $region14: #{tpu_custom_call.1} parent=1 // pred_check
      _
    $region15: #{tpu_custom_call.1} parent=1 // pred_check_branch
      %35 = sbr.rel (0) target = $region17
    $region16: #{tpu_custom_call.1} parent=1 // pred_region
      _
    $region17: #{tpu_custom_call.1} parent=1 // pred_fallthru
      _
    // Predicated region
    $region18: #{tpu_custom_call.1} parent=1 // pred_check
      _
    $region19: #{tpu_custom_call.1} parent=1 // pred_check_branch
      %37 = sbr.rel (0) target = $region21
    $region20: #{tpu_custom_call.1} parent=1 // pred_region
      %38 = dma.done [#allocation3], 32
    $region21: #{tpu_custom_call.1} parent=1 // pred_fallthru
      _
    // Predicated region
    $region22: #{tpu_custom_call.1} parent=1 // pred_check
      _
    $region23: #{tpu_custom_call.1} parent=1 // pred_check_branch
      %40 = sbr.rel (0) target = $region25
    $region24: #{tpu_custom_call.1} parent=1 // pred_region
      %41 = dma.done [#allocation6], 32
    $region25: #{tpu_custom_call.1} parent=1 // pred_fallthru
      _
    %v42 = vld [vmem:[#allocation2] sm:$0x3]
    %v43 = vld [vmem:[#allocation5] sm:$0x3]
    %v44 = vld [vmem:[%s2] sm:$0x3]
    %v45 = vld [vmem:[%s3] sm:$0x3]
    %v48 = vunpack.c.l.s4 1966171168
    %v49 = vunpack.c.0.s8 %v48
    %v50 = vlaneseq
    %v51 = vshrl.u32 %v50, 7
    %v52 = vsub.s32 %v49, %v51
    %v53 = vrot.slane %v42, %v52
    %v54 = vcombine.high %v53, %v53
    %v56 = vunpack.c.l.s4 1966171168
    %v57 = vunpack.c.0.s8 %v56
    %v58 = vlaneseq
    %v59 = vshrl.u32 %v58, 7
    %v60 = vsub.s32 %v57, %v59
    %v61 = vrot.slane %v53, %v60
    %v63 = vunpack.c.l.s4 1966171168
    %v64 = vunpack.c.0.s8 %v63
    %v65 = vlaneseq
    %v66 = vshrl.u32 %v65, 7
    %v67 = vsub.s32 %v64, %v66
    %v68 = vrot.slane %v54, %v67
    %v69 = vlaneseq
    %v70 = vshrl.u32 %v69, 7
    %v71 = vsub.s32 0, %v70
    %v72 = vrot.slane %v42, %v71
    %74 = vbcast.lane.b32.xlu0 %v72, 256
    %v75 = vpop.permute.xlu0 %74
    %v76 = vlaneseq
    %v77 = vshrl.u32 %v76, 7
    %v78 = vsub.s32 1, %v77
    %v79 = vrot.slane %v42, %v78
    %81 = vbcast.lane.b32.xlu0 %v79, 256
    %v82 = vpop.permute.xlu0 %81
    %v83 = vlaneseq
    %v84 = vshrl.u32 %v83, 7
    %v85 = vsub.s32 0, %v84
    %v86 = vrot.slane %v61, %v85
    %v87 = vlaneseq
    %v88 = vshrl.u32 %v87, 7
    %v89 = vsub.s32 0, %v88
    %v90 = vrot.slane %v68, %v89
    %v93 = vsub.f32 %v86, %v75
    %v94 = vsub.f32 %v90, %v82
    %v95 = vlaneseq
    %v96 = vshrl.u32 %v95, 7
    %v97 = vsub.s32 0, %v96
    %v98 = vrot.slane %v43, %v97
    %100 = vbcast.lane.b32.xlu0 %v98, 256
    %v101 = vpop.permute.xlu0 %100
    %v102 = vlaneseq
    %v103 = vshrl.u32 %v102, 7
    %v104 = vsub.s32 1, %v103
    %v105 = vrot.slane %v43, %v104
    %107 = vbcast.lane.b32.xlu0 %v105, 256
    %v108 = vpop.permute.xlu0 %107
    %v109 = vsub.f32 %v86, %v101
    %v110 = vsub.f32 %v90, %v108
    %vm111 = vcmp.gt.f32.partialorder %v93, 0.1
    %vm112 = vcmp.gt.f32.partialorder %v94, 0.1
    %v113 = vmul.f32 %v93, -1.0
    %v114 = vmul.f32 %v94, -1.0
    %v115 = vmul.f32 %v113, 1.442695
    %v116 = vpow.pop %v115
    %v117 = vmul.f32 %v114, 1.442695
    %v118 = vpow.pop %v117
    %v119 = vsel %vm111, %v116, 0.0
    %v120 = vsel %vm112, %v118, 0.0
    %vm121 = vcmp.gt.f32.partialorder %v109, 0.1
    %vm122 = vcmp.gt.f32.partialorder %v110, 0.1
    %v123 = vmul.f32 %v109, -1.0
    %v124 = vmul.f32 %v110, -1.0
    %v125 = vmul.f32 %v123, 1.442695
    %v126 = vpow.pop %v125
    %v127 = vmul.f32 %v124, 1.442695
    %v128 = vpow.pop %v127
    %v129 = vsel %vm121, %v126, 0.0
    %v130 = vsel %vm122, %v128, 0.0
    %v131 = vlaneseq
    %v132 = vshrl.u32 %v131, 7
    %v133 = vsub.s32 0, %v132
    %v134 = vrot.slane %v44, %v133
    %136 = vbcast.lane.b32.xlu0 %v134, 256
    %v137 = vpop.permute.xlu0 %136
    %v138 = vlaneseq
    %v139 = vshrl.u32 %v138, 7
    %v140 = vsub.s32 1, %v139
    %v141 = vrot.slane %v44, %v140
    %143 = vbcast.lane.b32.xlu0 %v141, 256
    %v144 = vpop.permute.xlu0 %143
    %vm145 = vcmp.eq.s32.totalorder %v137, 2
    %vm146 = vcmp.eq.s32.totalorder %v144, 2
    %v147 = vsel %vm145, 1, 0
    %v148 = vsel %vm146, 1, 0
    %vm149 = vcmp.eq.s32.totalorder %v147, 1
    %vm150 = vcmp.eq.s32.totalorder %v148, 1
    %v151 = vsel %vm149, %v119, 0.0
    %v152 = vsel %vm150, %v120, 0.0
    %vm153 = vcmask 64512
    %v154 = vsel %vm153, %v151, 0.0
    %v155 = vrot.slane %v154, 4
    %v156 = vadd.f32 %v154, %v155
    %v157 = vrot.slane %v156, 2
    %v158 = vadd.f32 %v156, %v157
    %v159 = vrot.slane %v158, 1
    %v160 = vadd.f32 %v158, %v159
    %v161 = vsel %vm153, %v152, 0.0
    %v162 = vrot.slane %v161, 4
    %v163 = vadd.f32 %v161, %v162
    %v164 = vrot.slane %v163, 2
    %v165 = vadd.f32 %v163, %v164
    %v166 = vrot.slane %v165, 1
    %v167 = vadd.f32 %v165, %v166
    %v168 = vlaneseq
    %v169 = vshrl.u32 %v168, 7
    %v170 = vsub.s32 0, %v169
    %v171 = vrot.slane %v45, %v170
    %173 = vbcast.lane.b32.xlu0 %v171, 256
    %v174 = vpop.permute.xlu0 %173
    %v175 = vlaneseq
    %v176 = vshrl.u32 %v175, 7
    %v177 = vsub.s32 1, %v176
    %v178 = vrot.slane %v45, %v177
    %180 = vbcast.lane.b32.xlu0 %v178, 256
    %v181 = vpop.permute.xlu0 %180
    %vm182 = vcmp.eq.s32.totalorder %v174, 2
    %vm183 = vcmp.eq.s32.totalorder %v181, 2
    %v184 = vsel %vm182, 1, 0
    %v185 = vsel %vm183, 1, 0
    %vm186 = vcmp.eq.s32.totalorder %v184, 1
    %vm187 = vcmp.eq.s32.totalorder %v185, 1
    %v188 = vsel %vm186, %v129, 0.0
    %v189 = vsel %vm187, %v130, 0.0
    %v190 = vsel %vm153, %v188, 0.0
    %v191 = vrot.slane %v190, 4
    %v192 = vadd.f32 %v190, %v191
    %v193 = vrot.slane %v192, 2
    %v194 = vadd.f32 %v192, %v193
    %v195 = vrot.slane %v194, 1
    %v196 = vadd.f32 %v194, %v195
    %v197 = vsel %vm153, %v189, 0.0
    %v198 = vrot.slane %v197, 4
    %v199 = vadd.f32 %v197, %v198
    %v200 = vrot.slane %v199, 2
    %v201 = vadd.f32 %v199, %v200
    %v202 = vrot.slane %v201, 1
    %v203 = vadd.f32 %v201, %v202
    %v204 = vadd.f32 %v160, %v196
    %v205 = vadd.f32 %v167, %v203
    %v206 = vmul.f32 %v204, 0.09
    %v207 = vmul.f32 %v205, 0.09
    %v208 = vadd.f32 %v206, 0.1
    %v209 = vadd.f32 %v207, 0.1
    %vm210 = vcmp.ge.f32.partialorder %v208, 0.0
    %vm211 = vcmp.ge.f32.partialorder %v209, 0.0
    %v212 = vmax.f32 %v208, 0.1
    %v213 = vmax.f32 %v209, 0.1
    %v214 = vmul.f32 %v208, 1.442695
    %v215 = vpow.pop %v214
    %v216 = vmul.f32 %v209, 1.442695
    %v217 = vpow.pop %v216
    %v218 = vsel %vm210, %v212, %v215
    %v219 = vsel %vm211, %v213, %v217
    %vm222 = vcmask 1041409
    %v223 = vsel %vm222, %v219, %v218
    %vm225 = vcmask 58368
    %226 = vst.msk [vmem:[#allocation7] sm:$0x3] %vm225, %v223
    %vm227 = vcmp.eq.s32.totalorder %v137, 3
    %vm228 = vcmp.eq.s32.totalorder %v144, 3
    %v229 = vsel %vm227, 1, 0
    %v230 = vsel %vm228, 1, 0
    %vm231 = vcmp.eq.s32.totalorder %v229, 1
    %vm232 = vcmp.eq.s32.totalorder %v230, 1
    %v233 = vsel %vm231, %v119, 0.0
    %v234 = vsel %vm232, %v120, 0.0
    %v235 = vsel %vm153, %v233, 0.0
    %v236 = vrot.slane %v235, 4
    %v237 = vadd.f32 %v235, %v236
    %v238 = vrot.slane %v237, 2
    %v239 = vadd.f32 %v237, %v238
    %v240 = vrot.slane %v239, 1
    %v241 = vadd.f32 %v239, %v240
    %v242 = vsel %vm153, %v234, 0.0
    %v243 = vrot.slane %v242, 4
    %v244 = vadd.f32 %v242, %v243
    %v245 = vrot.slane %v244, 2
    %v246 = vadd.f32 %v244, %v245
    %v247 = vrot.slane %v246, 1
    %v248 = vadd.f32 %v246, %v247
    %vm249 = vcmp.eq.s32.totalorder %v174, 3
    %vm250 = vcmp.eq.s32.totalorder %v181, 3
    %v251 = vsel %vm249, 1, 0
    %v252 = vsel %vm250, 1, 0
    %vm253 = vcmp.eq.s32.totalorder %v251, 1
    %vm254 = vcmp.eq.s32.totalorder %v252, 1
    %v255 = vsel %vm253, %v129, 0.0
    %v256 = vsel %vm254, %v130, 0.0
    %v257 = vsel %vm153, %v255, 0.0
    %v258 = vrot.slane %v257, 4
    %v259 = vadd.f32 %v257, %v258
    %v260 = vrot.slane %v259, 2
    %v261 = vadd.f32 %v259, %v260
    %v262 = vrot.slane %v261, 1
    %v263 = vadd.f32 %v261, %v262
    %v264 = vsel %vm153, %v256, 0.0
    %v265 = vrot.slane %v264, 4
    %v266 = vadd.f32 %v264, %v265
    %v267 = vrot.slane %v266, 2
    %v268 = vadd.f32 %v266, %v267
    %v269 = vrot.slane %v268, 1
    %v270 = vadd.f32 %v268, %v269
    %v271 = vadd.f32 %v241, %v263
    %v272 = vadd.f32 %v248, %v270
    %v273 = vmul.f32 %v271, 0.1
    %v274 = vmul.f32 %v272, 0.1
    %v275 = vadd.f32 %v273, 0.4
    %v276 = vadd.f32 %v274, 0.4
    %vm277 = vcmp.ge.f32.partialorder %v275, 0.0
    %vm278 = vcmp.ge.f32.partialorder %v276, 0.0
    %v279 = vmax.f32 %v275, 0.4
    %v280 = vmax.f32 %v276, 0.4
    %v281 = vmul.f32 %v275, 1.442695
    %v282 = vpow.pop %v281
    %v283 = vmul.f32 %v276, 1.442695
    %v284 = vpow.pop %v283
    %v285 = vsel %vm277, %v279, %v282
    %v286 = vsel %vm278, %v280, %v284
    %v289 = vsel %vm222, %v286, %v285
    %s291 = scalar_lea.vmem [#allocation7], 2
    %292 = vst.msk [vmem:[%s291] sm:$0x3] %vm225, %v289
    %vm293 = vcmp.eq.s32.totalorder %v137, 0
    %vm294 = vcmp.eq.s32.totalorder %v144, 0
    %v295 = vsel %vm293, 1, 0
    %v296 = vsel %vm294, 1, 0
    %vm297 = vcmp.eq.s32.totalorder %v295, 1
    %vm298 = vcmp.eq.s32.totalorder %v296, 1
    %v299 = vsel %vm297, %v119, 0.0
    %v300 = vsel %vm298, %v120, 0.0
    %v301 = vsel %vm153, %v299, 0.0
    %v302 = vrot.slane %v301, 4
    %v303 = vadd.f32 %v301, %v302
    %v304 = vrot.slane %v303, 2
    %v305 = vadd.f32 %v303, %v304
    %v306 = vrot.slane %v305, 1
    %v307 = vadd.f32 %v305, %v306
    %v308 = vsel %vm153, %v300, 0.0
    %v309 = vrot.slane %v308, 4
    %v310 = vadd.f32 %v308, %v309
    %v311 = vrot.slane %v310, 2
    %v312 = vadd.f32 %v310, %v311
    %v313 = vrot.slane %v312, 1
    %v314 = vadd.f32 %v312, %v313
    %vm315 = vcmp.eq.s32.totalorder %v174, 0
    %vm316 = vcmp.eq.s32.totalorder %v181, 0
    %v317 = vsel %vm315, 1, 0
    %v318 = vsel %vm316, 1, 0
    %vm319 = vcmp.eq.s32.totalorder %v317, 1
    %vm320 = vcmp.eq.s32.totalorder %v318, 1
    %v321 = vsel %vm319, %v129, 0.0
    %v322 = vsel %vm320, %v130, 0.0
    %v323 = vsel %vm153, %v321, 0.0
    %v324 = vrot.slane %v323, 4
    %v325 = vadd.f32 %v323, %v324
    %v326 = vrot.slane %v325, 2
    %v327 = vadd.f32 %v325, %v326
    %v328 = vrot.slane %v327, 1
    %v329 = vadd.f32 %v327, %v328
    %v330 = vsel %vm153, %v322, 0.0
    %v331 = vrot.slane %v330, 4
    %v332 = vadd.f32 %v330, %v331
    %v333 = vrot.slane %v332, 2
    %v334 = vadd.f32 %v332, %v333
    %v335 = vrot.slane %v334, 1
    %v336 = vadd.f32 %v334, %v335
    %v337 = vadd.f32 %v307, %v329
    %v338 = vadd.f32 %v314, %v336
    %v339 = vmul.f32 %v337, 0.9
    %v340 = vmul.f32 %v338, 0.9
    %v341 = vadd.f32 %v339, 0.2
    %v342 = vadd.f32 %v340, 0.2
    %vm343 = vcmp.ge.f32.partialorder %v341, 0.0
    %vm344 = vcmp.ge.f32.partialorder %v342, 0.0
    %v345 = vmax.f32 %v341, 0.2
    %v346 = vmax.f32 %v342, 0.2
    %v347 = vmul.f32 %v341, 1.442695
    %v348 = vpow.pop %v347
    %v349 = vmul.f32 %v342, 1.442695
    %v350 = vpow.pop %v349
    %v351 = vsel %vm343, %v345, %v348
    %v352 = vsel %vm344, %v346, %v350
    %v355 = vsel %vm222, %v352, %v351
    %s357 = scalar_lea.vmem [#allocation7], 4
    %358 = vst.msk [vmem:[%s357] sm:$0x3] %vm225, %v355
    %vm359 = vcmp.eq.s32.totalorder %v137, 1
    %vm360 = vcmp.eq.s32.totalorder %v144, 1
    %v361 = vsel %vm359, 1, 0
    %v362 = vsel %vm360, 1, 0
    %vm363 = vcmp.eq.s32.totalorder %v361, 1
    %vm364 = vcmp.eq.s32.totalorder %v362, 1
    %v365 = vsel %vm363, %v119, 0.0
    %v366 = vsel %vm364, %v120, 0.0
    %v367 = vsel %vm153, %v365, 0.0
    %v368 = vrot.slane %v367, 4
    %v369 = vadd.f32 %v367, %v368
    %v370 = vrot.slane %v369, 2
    %v371 = vadd.f32 %v369, %v370
    %v372 = vrot.slane %v371, 1
    %v373 = vadd.f32 %v371, %v372
    %v374 = vsel %vm153, %v366, 0.0
    %v375 = vrot.slane %v374, 4
    %v376 = vadd.f32 %v374, %v375
    %v377 = vrot.slane %v376, 2
    %v378 = vadd.f32 %v376, %v377
    %v379 = vrot.slane %v378, 1
    %v380 = vadd.f32 %v378, %v379
    %vm381 = vcmp.eq.s32.totalorder %v174, 1
    %vm382 = vcmp.eq.s32.totalorder %v181, 1
    %v383 = vsel %vm381, 1, 0
    %v384 = vsel %vm382, 1, 0
    %vm385 = vcmp.eq.s32.totalorder %v383, 1
    %vm386 = vcmp.eq.s32.totalorder %v384, 1
    %v387 = vsel %vm385, %v129, 0.0
    %v388 = vsel %vm386, %v130, 0.0
    %v389 = vsel %vm153, %v387, 0.0
    %v390 = vrot.slane %v389, 4
    %v391 = vadd.f32 %v389, %v390
    %v392 = vrot.slane %v391, 2
    %v393 = vadd.f32 %v391, %v392
    %v394 = vrot.slane %v393, 1
    %v395 = vadd.f32 %v393, %v394
    %v396 = vsel %vm153, %v388, 0.0
    %v397 = vrot.slane %v396, 4
    %v398 = vadd.f32 %v396, %v397
    %v399 = vrot.slane %v398, 2
    %v400 = vadd.f32 %v398, %v399
    %v401 = vrot.slane %v400, 1
    %v402 = vadd.f32 %v400, %v401
    %v403 = vadd.f32 %v373, %v395
    %v404 = vadd.f32 %v380, %v402
    %v405 = vmul.f32 %v403, 0.5
    %v406 = vmul.f32 %v404, 0.5
    %v407 = vadd.f32 %v405, 0.3
    %v408 = vadd.f32 %v406, 0.3
    %vm409 = vcmp.ge.f32.partialorder %v407, 0.0
    %vm410 = vcmp.ge.f32.partialorder %v408, 0.0
    %v411 = vmax.f32 %v407, 0.3
    %v412 = vmax.f32 %v408, 0.3
    %v413 = vmul.f32 %v407, 1.442695
    %v414 = vpow.pop %v413
    %v415 = vmul.f32 %v408, 1.442695
    %v416 = vpow.pop %v415
    %v417 = vsel %vm409, %v411, %v414
    %v418 = vsel %vm410, %v412, %v416
    %v421 = vsel %vm222, %v418, %v417
    %s423 = scalar_lea.vmem [#allocation7], 6
    %424 = vst.msk [vmem:[%s423] sm:$0x3] %vm225, %v421
    // Predicated region
    $region26: #{tpu_custom_call.1} parent=1 // pred_check
      _
    $region27: #{tpu_custom_call.1} parent=1 // pred_check_branch
      %426 = sbr.rel (0) target = $region29
    $region28: #{tpu_custom_call.1} parent=1 // pred_region
      %s428 = ssub.s32 128, 128
      %429 = vsyncadd [#allocation4], %s428
      %s430 = sshll.u32 [#allocation7], 4
      %s431 = int_to_ptr.vmem [resolvable:$true] %s430
      %436 = dma.vmem_to_hbm [thread:$0]  %s431, 128, %s4, [#allocation4], 32, 32, 2
    $region29: #{tpu_custom_call.1} parent=1 // pred_fallthru
      _
    // Predicated region
    $region30: #{tpu_custom_call.1} parent=1 // pred_check
      _
    $region31: #{tpu_custom_call.1} parent=1 // pred_check_branch
      %438 = sbr.rel (0) target = $region33
    $region32: #{tpu_custom_call.1} parent=1 // pred_region
      %439 = dma.done [#allocation4], 128
    $region33: #{tpu_custom_call.1} parent=1 // pred_fallthru
      _
    %440 = vsyncpa [#allocation3], 1
    %441 = vsyncpa [#allocation6], 1
    %442 = vsyncpa [#allocation4], 1

</llo_original>
